<compile_context>
chip_gen: v5e
topology: v5e:2x2
jax: 0.10.0
libtpu: 0.0.40
codegen_flags: <defaults>
</compile_context>

<pallas_src>
import jax
import jax.numpy as jnp
from jax.experimental import pallas as pl
from jax.experimental.pallas import tpu as pltpu

LANE = 128     # lane width (last-dim granularity)
SUBLANE = 8    # sublane granularity (second-to-last dim)


def _round_up(n, m):
    return ((n + m - 1) // m) * m


def _cdiv(a, b):
    return -(-a // b)


def _num_tensorcores():
    """Best-effort TensorCore-per-chip query (v7x has 2); defaults to 1."""
    try:
        info = pltpu.get_tpu_info()
        for attr in ("num_cores", "num_tensorcores", "tensorcore_count",
                     "core_count", "cores_per_chip"):
            v = getattr(info, attr, None)
            if isinstance(v, int) and 0 < v <= 8:
                return v
    except Exception:
        pass
    try:
        v = getattr(jax.devices()[0], "num_cores", None)
        if isinstance(v, int) and 0 < v <= 8:
            return v
    except Exception:
        pass
    return 1


# -----------------------------------------------------------------------------
# Kernel
# -----------------------------------------------------------------------------
def autoencoder_kernel(
    x_ref,
    # encoder params (W as (in, out), b as (1, out)), lane-padded
    we0_ref, be0_ref, we1_ref, be1_ref, we2_ref, be2_ref, we3_ref, be3_ref,
    # decoder params
    wd0_ref, bd0_ref, wd1_ref, bd1_ref, wd2_ref, bd2_ref, wd3_ref, bd3_ref,
    # single packed output: enc at cols [0:out_n], dec at [out_n:out_n+in_n]
    out_ref,
):
    """One batch tile of the full encoder+decoder chain (8 matmuls, 6 ReLUs)."""

    def linear_relu(h, w_ref, b_ref):
        # MXU matmul with f32 accumulation; bias-add + ReLU in the bias dtype
        # (bf16 on the bf16 path — native on v6e/v7x VPU), then back to the
        # matmul dtype for the next layer (no-op cast in most configs).
        acc = jnp.dot(h, w_ref[...], preferred_element_type=jnp.float32)
        return jnp.maximum(acc.astype(b_ref.dtype) + b_ref[...], 0).astype(w_ref.dtype)

    def linear_out(h, w_ref, b_ref):
        # Output layers: f32 accumulation and f32 bias (bias kept f32).
        acc = jnp.dot(h, w_ref[...], preferred_element_type=jnp.float32)
        return acc + b_ref[...]

    h = x_ref[...]

    # ---- encoder ----
    h = linear_relu(h, we0_ref, be0_ref)
    h = linear_relu(h, we1_ref, be1_ref)
    h = linear_relu(h, we2_ref, be2_ref)
    # Encoder output, already placed in packed columns [0:output_num];
    # padded columns are exactly zero (zero weight cols / zero bias).
    enc_packed = linear_out(h, we3_ref, be3_ref)            # f32, (tile_b, pack_pad)

    # ---- decoder (consumes encoded directly, no activation in between) ----
    h = enc_packed.astype(wd0_ref.dtype)
    h = linear_relu(h, wd0_ref, bd0_ref)
    h = linear_relu(h, wd1_ref, bd1_ref)
    h = linear_relu(h, wd2_ref, bd2_ref)
    # Decoder output placed in packed columns [output_num:output_num+input_num].
    dec_packed = linear_out(h, wd3_ref, bd3_ref)            # f32, (tile_b, pack_pad)

    # Disjoint non-zero column ranges -> exact interleave; single lane-dense
    # unmasked store.
    out_ref[...] = (enc_packed + dec_packed).astype(out_ref.dtype)


# -----------------------------------------------------------------------------
# Parameter preparation (hoist out of the per-call path; call once & cache)
# -----------------------------------------------------------------------------
def prepare_params(params, *, use_bf16=True):
    """params: list of 8 (W, b) with W as (in, out).

    Returns a dict with lane-padded / packed / dtype-cast parameter arrays and
    the metadata the forward pass needs.  Zero padding is exact: padded weight
    rows/cols and bias entries are 0, so padded activation columns stay 0.
    """
    input_num = params[0][0].shape[0]
    output_num = params[3][0].shape[1]
    cdt = jnp.bfloat16 if use_bf16 else jnp.float32

    # Feature sizes along the chain: [in, h0, h1, h2, out, h2, h1, h0, in]
    dims = [w.shape[0] for (w, _) in params] + [params[-1][0].shape[1]]
    pack_pad = _round_up(output_num + input_num, LANE)
    dims_pad = [_round_up(d, LANE) for d in dims]
    # Packed widths: encoder output / decoder input (index 4) and decoder
    # output (index 8) both live in the packed lane range.
    dims_pad[4] = pack_pad
    dims_pad[8] = pack_pad
    # Column offset inside the padded output width for each layer's real cols.
    col_off = [0] * 8
    col_off[7] = output_num          # decoder final layer -> cols [out_n:out_n+in_n]

    flat = []
    for li, (w, b) in enumerate(params):
        fi, fo = w.shape
        fi_p, fo_p = dims_pad[li], dims_pad[li + 1]
        off = col_off[li]
        w_p = jnp.zeros((fi_p, fo_p), jnp.float32).at[:fi, off:off + fo].set(w)
        b_p = jnp.zeros((1, fo_p), jnp.float32).at[:, off:off + fo].set(
            jnp.reshape(b, (1, fo)))
        is_output_layer = li in (3, 7)       # keep f32 epilogue on output layers
        flat.append(w_p.astype(cdt))
        flat.append(b_p if is_output_layer else b_p.astype(cdt))

    return dict(flat_params=flat, dims_pad=dims_pad, pack_pad=pack_pad,
                compute_dtype=cdt, input_num=input_num, output_num=output_num)


# -----------------------------------------------------------------------------
# Tiling heuristics
# -----------------------------------------------------------------------------
def _choose_tile_b(batch, num_cores, cap=1024):
    """Right-size the batch tile: minimal padding, <= `cap` rows per step,
    and (only when >1 TensorCore) enough / balanced steps for megacore."""
    b8 = _round_up(max(batch, 1), SUBLANE)
    steps = _cdiv(b8, cap)
    if num_cores > 1 and b8 > SUBLANE * num_cores:
        steps = _round_up(max(steps, num_cores), num_cores)
    return _round_up(_cdiv(b8, steps), SUBLANE)


# -----------------------------------------------------------------------------
# Forward
# -----------------------------------------------------------------------------
def autoencoder_forward(x, prepared, *, tile_b=None):
    """x: (B, input_num) float32.  prepared: output of prepare_params()."""
    flat_params = prepared["flat_params"]
    dims_pad = prepared["dims_pad"]
    pack_pad = prepared["pack_pad"]
    cdt = prepared["compute_dtype"]
    input_num = prepared["input_num"]
    output_num = prepared["output_num"]

    B = x.shape[0]
    in_pad = dims_pad[0]

    if tile_b is None:
        tile_b = _choose_tile_b(B, _num_tensorcores())
    tile_b = _round_up(tile_b, SUBLANE)
    B_pad = _round_up(max(B, 1), tile_b)
    grid = (B_pad // tile_b,)

    # Cast BEFORE padding (never materialise a padded f32 copy of x).
    x_p = jnp.pad(x.astype(cdt), ((0, B_pad - B), (0, in_pad - input_num)))

    x_spec = pl.BlockSpec((tile_b, in_pad), lambda i: (i, 0))
    out_spec = pl.BlockSpec((tile_b, pack_pad), lambda i: (i, 0))
    # Tiny parameters: single resident VMEM copy, no pipelining.
    resident = pl.BlockSpec(memory_space=pltpu.MemorySpace.VMEM)
    param_specs = [resident] * len(flat_params)

    out_shape = jax.ShapeDtypeStruct((B_pad, pack_pad), jnp.float32)

    # VMEM budget: resident params + double-buffered in/out tiles + headroom
    # for live intermediates.  Guards v5e's 16 MiB default scoped limit while
    # staying well under v7x's 64 MiB physical VMEM.
    params_bytes = sum(int(p.size) * p.dtype.itemsize for p in flat_params)
    cdt_size = jnp.dtype(cdt).itemsize
    max_pad = max(dims_pad + [pack_pad])
    vmem_est = (params_bytes
                + 2 * tile_b * in_pad * cdt_size       # pipelined input
                + 2 * tile_b * pack_pad * 4            # pipelined output
                + 6 * tile_b * max_pad * 4)            # live intermediates
    vmem_limit = min(max(2 * vmem_est, 32 << 20), 48 << 20)

    # Advisory cost hint so XLA schedules this kernel sensibly inside a graph.
    layer_dims = list(zip(dims_pad[:-1], dims_pad[1:]))
    flops = 2 * B_pad * sum(fi * fo for fi, fo in layer_dims)
    bytes_accessed = (int(x_p.size) * x_p.dtype.itemsize
                      + params_bytes
                      + B_pad * pack_pad * 4)

    packed = pl.pallas_call(
        autoencoder_kernel,
        out_shape=out_shape,
        grid_spec=pltpu.PrefetchScalarGridSpec(
            num_scalar_prefetch=0,
            grid=grid,
            in_specs=[x_spec] + param_specs,
            out_specs=out_spec,
        ),
        compiler_params=pltpu.CompilerParams(
            dimension_semantics=("parallel",),
            vmem_limit_bytes=int(vmem_limit),
        ),
        cost_estimate=pl.CostEstimate(
            flops=flops, transcendentals=0, bytes_accessed=bytes_accessed),
    )(x_p, *flat_params)

    # Unpack: enc at cols [0:output_num], dec at [output_num:output_num+input_num].
    encoded = packed[:B, :output_num]
    decoded = packed[:B, output_num:output_num + input_num]
    return encoded, decoded


# -----------------------------------------------------------------------------
# Init / reference
# -----------------------------------------------------------------------------
def init_linear(key, fan_in, fan_out):
    """Deterministic init mimicking PyTorch nn.Linear defaults.
    Weight returned pre-transposed as (in, out); bias as (1, out)."""
    kw, kb = jax.random.split(key)
    bound = 1.0 / jnp.sqrt(jnp.float32(fan_in))
    w = jax.random.uniform(kw, (fan_in, fan_out), jnp.float32, -bound, bound)
    b = jax.random.uniform(kb, (1, fan_out), jnp.float32, -bound, bound)
    return w, b


def make_params(key, input_num, hidden_units, output_num):
    enc_dims = [input_num, hidden_units[0], hidden_units[1], hidden_units[2], output_num]
    dec_dims = list(reversed(enc_dims))
    dims = list(zip(enc_dims[:-1], enc_dims[1:])) + list(zip(dec_dims[:-1], dec_dims[1:]))
    keys = jax.random.split(key, len(dims))
    return [init_linear(k, fi, fo) for k, (fi, fo) in zip(keys, dims)]


def reference_forward(x, params):
    """Pure-JAX f32 reference for correctness checking."""
    h = x
    for idx in range(4):
        w, b = params[idx]
        h = h @ w + b
        if idx < 3:
            h = jnp.maximum(h, 0.0)
    encoded = h
    h = encoded
    for idx in range(4, 8):
        w, b = params[idx]
        h = h @ w + b
        if idx < 7:
            h = jnp.maximum(h, 0.0)
    decoded = h
    return encoded, decoded


if __name__ == "__main__":
    # Shapes consistent with the module's forward:
    # Autoencoder(input_num=32, hidden_units=[64, 32, 16], output_num=8)
    input_num = 32
    hidden_units = [64, 32, 16]
    output_num = 8
    batch = 16

    key = jax.random.PRNGKey(0)
    kx, kp = jax.random.split(key)
    x = jax.random.normal(kx, (batch, input_num), dtype=jnp.float32)
    params = make_params(kp, input_num, hidden_units, output_num)

    enc_gold, dec_gold = reference_forward(x, params)

    # f32 path: checks padding / packing / tiling wiring tightly.
    prep_f32 = prepare_params(params, use_bf16=False)
    enc_f32, dec_f32 = autoencoder_forward(x, prep_f32)
    jax.block_until_ready((enc_f32, dec_f32))
    assert enc_f32.shape == (batch, output_num)
    assert dec_f32.shape == (batch, input_num)
    assert jnp.allclose(enc_f32, enc_gold, atol=1e-5, rtol=1e-5)
    assert jnp.allclose(dec_f32, dec_gold, atol=1e-5, rtol=1e-5)

    # bf16-matmul / f32-accumulate path (default; faster MXU path on v6e/v7x).
    prep_bf16 = prepare_params(params, use_bf16=True)
    enc_bf, dec_bf = autoencoder_forward(x, prep_bf16)
    jax.block_until_ready((enc_bf, dec_bf))
    assert enc_bf.shape == (batch, output_num)
    assert dec_bf.shape == (batch, input_num)
    assert jnp.allclose(enc_bf, enc_gold, atol=5e-2, rtol=5e-2)
    assert jnp.allclose(dec_bf, dec_gold, atol=5e-2, rtol=5e-2)

    print("KERNEL_OK")
</pallas_src>

<mosaic_0001>
module attributes {stable_mosaic.version = 11 : i64} {
  func.func @autoencoder_kernel(%arg0: i32, %arg1: memref<16x128xf32, #tpu.memory_space<vmem>>, %arg2: memref<128x128xf32, #tpu.memory_space<vmem>>, %arg3: memref<1x128xf32, #tpu.memory_space<vmem>>, %arg4: memref<128x128xf32, #tpu.memory_space<vmem>>, %arg5: memref<1x128xf32, #tpu.memory_space<vmem>>, %arg6: memref<128x128xf32, #tpu.memory_space<vmem>>, %arg7: memref<1x128xf32, #tpu.memory_space<vmem>>, %arg8: memref<128x128xf32, #tpu.memory_space<vmem>>, %arg9: memref<1x128xf32, #tpu.memory_space<vmem>>, %arg10: memref<128x128xf32, #tpu.memory_space<vmem>>, %arg11: memref<1x128xf32, #tpu.memory_space<vmem>>, %arg12: memref<128x128xf32, #tpu.memory_space<vmem>>, %arg13: memref<1x128xf32, #tpu.memory_space<vmem>>, %arg14: memref<128x128xf32, #tpu.memory_space<vmem>>, %arg15: memref<1x128xf32, #tpu.memory_space<vmem>>, %arg16: memref<128x128xf32, #tpu.memory_space<vmem>>, %arg17: memref<1x128xf32, #tpu.memory_space<vmem>>, %arg18: memref<16x128xf32, #tpu.memory_space<vmem>>) attributes {dimension_semantics = [#tpu.dimension_semantics<parallel>], iteration_bounds = array<i64: 1>, scalar_prefetch = 0 : i64, scratch_operands = 0 : i64, tpu.core_type = #tpu.core_type<tc>, window_params = [{transform_indices = @transform_0, window_bounds = array<i64: 16, 128>}, {pipeline_mode = #tpu.pipeline_mode<synchronous>, transform_indices = @transform_1, window_bounds = array<i64: 128, 128>}, {pipeline_mode = #tpu.pipeline_mode<synchronous>, transform_indices = @transform_2, window_bounds = array<i64: 1, 128>}, {pipeline_mode = #tpu.pipeline_mode<synchronous>, transform_indices = @transform_3, window_bounds = array<i64: 128, 128>}, {pipeline_mode = #tpu.pipeline_mode<synchronous>, transform_indices = @transform_4, window_bounds = array<i64: 1, 128>}, {pipeline_mode = #tpu.pipeline_mode<synchronous>, transform_indices = @transform_5, window_bounds = array<i64: 128, 128>}, {pipeline_mode = #tpu.pipeline_mode<synchronous>, transform_indices = @transform_6, window_bounds = array<i64: 1, 128>}, {pipeline_mode = #tpu.pipeline_mode<synchronous>, transform_indices = @transform_7, window_bounds = array<i64: 128, 128>}, {pipeline_mode = #tpu.pipeline_mode<synchronous>, transform_indices = @transform_8, window_bounds = array<i64: 1, 128>}, {pipeline_mode = #tpu.pipeline_mode<synchronous>, transform_indices = @transform_9, window_bounds = array<i64: 128, 128>}, {pipeline_mode = #tpu.pipeline_mode<synchronous>, transform_indices = @transform_10, window_bounds = array<i64: 1, 128>}, {pipeline_mode = #tpu.pipeline_mode<synchronous>, transform_indices = @transform_11, window_bounds = array<i64: 128, 128>}, {pipeline_mode = #tpu.pipeline_mode<synchronous>, transform_indices = @transform_12, window_bounds = array<i64: 1, 128>}, {pipeline_mode = #tpu.pipeline_mode<synchronous>, transform_indices = @transform_13, window_bounds = array<i64: 128, 128>}, {pipeline_mode = #tpu.pipeline_mode<synchronous>, transform_indices = @transform_14, window_bounds = array<i64: 1, 128>}, {pipeline_mode = #tpu.pipeline_mode<synchronous>, transform_indices = @transform_15, window_bounds = array<i64: 128, 128>}, {pipeline_mode = #tpu.pipeline_mode<synchronous>, transform_indices = @transform_16, window_bounds = array<i64: 1, 128>}, {transform_indices = @transform_17, window_bounds = array<i64: 16, 128>}]} {
    %c0 = arith.constant 0 : index
    %c0_0 = arith.constant 0 : index
    %0 = vector.load %arg1[%c0, %c0_0] : memref<16x128xf32, #tpu.memory_space<vmem>>, vector<16x128xf32>
    %c0_1 = arith.constant 0 : index
    %c0_2 = arith.constant 0 : index
    %1 = vector.load %arg2[%c0_1, %c0_2] : memref<128x128xf32, #tpu.memory_space<vmem>>, vector<128x128xf32>
    %cst = arith.constant dense<0.000000e+00> : vector<16x128xf32>
    %2 = tpu.matmul %0, %1, %cst {dimension_numbers = #tpu.dot_dimension_numbers<[1], [0], [0], [1], [0, 0, 1, 1], [], []>} : vector<16x128xf32>, vector<128x128xf32>, vector<16x128xf32> -> vector<16x128xf32>
    %c0_3 = arith.constant 0 : index
    %c0_4 = arith.constant 0 : index
    %3 = vector.load %arg3[%c0_3, %c0_4] : memref<1x128xf32, #tpu.memory_space<vmem>>, vector<1x128xf32>
    %4 = vector.broadcast %3 : vector<1x128xf32> to vector<16x128xf32>
    %5 = arith.addf %2, %4 : vector<16x128xf32>
    %cst_5 = arith.constant 0.000000e+00 : f32
    %6 = vector.broadcast %cst_5 : f32 to vector<16x128xf32>
    %7 = arith.maximumf %5, %6 : vector<16x128xf32>
    %c0_6 = arith.constant 0 : index
    %c0_7 = arith.constant 0 : index
    %8 = vector.load %arg4[%c0_6, %c0_7] : memref<128x128xf32, #tpu.memory_space<vmem>>, vector<128x128xf32>
    %cst_8 = arith.constant dense<0.000000e+00> : vector<16x128xf32>
    %9 = tpu.matmul %7, %8, %cst_8 {dimension_numbers = #tpu.dot_dimension_numbers<[1], [0], [0], [1], [0, 0, 1, 1], [], []>} : vector<16x128xf32>, vector<128x128xf32>, vector<16x128xf32> -> vector<16x128xf32>
    %c0_9 = arith.constant 0 : index
    %c0_10 = arith.constant 0 : index
    %10 = vector.load %arg5[%c0_9, %c0_10] : memref<1x128xf32, #tpu.memory_space<vmem>>, vector<1x128xf32>
    %11 = vector.broadcast %10 : vector<1x128xf32> to vector<16x128xf32>
    %12 = arith.addf %9, %11 : vector<16x128xf32>
    %cst_11 = arith.constant 0.000000e+00 : f32
    %13 = vector.broadcast %cst_11 : f32 to vector<16x128xf32>
    %14 = arith.maximumf %12, %13 : vector<16x128xf32>
    %c0_12 = arith.constant 0 : index
    %c0_13 = arith.constant 0 : index
    %15 = vector.load %arg6[%c0_12, %c0_13] : memref<128x128xf32, #tpu.memory_space<vmem>>, vector<128x128xf32>
    %cst_14 = arith.constant dense<0.000000e+00> : vector<16x128xf32>
    %16 = tpu.matmul %14, %15, %cst_14 {dimension_numbers = #tpu.dot_dimension_numbers<[1], [0], [0], [1], [0, 0, 1, 1], [], []>} : vector<16x128xf32>, vector<128x128xf32>, vector<16x128xf32> -> vector<16x128xf32>
    %c0_15 = arith.constant 0 : index
    %c0_16 = arith.constant 0 : index
    %17 = vector.load %arg7[%c0_15, %c0_16] : memref<1x128xf32, #tpu.memory_space<vmem>>, vector<1x128xf32>
    %18 = vector.broadcast %17 : vector<1x128xf32> to vector<16x128xf32>
    %19 = arith.addf %16, %18 : vector<16x128xf32>
    %cst_17 = arith.constant 0.000000e+00 : f32
    %20 = vector.broadcast %cst_17 : f32 to vector<16x128xf32>
    %21 = arith.maximumf %19, %20 : vector<16x128xf32>
    %c0_18 = arith.constant 0 : index
    %c0_19 = arith.constant 0 : index
    %22 = vector.load %arg8[%c0_18, %c0_19] : memref<128x128xf32, #tpu.memory_space<vmem>>, vector<128x128xf32>
    %cst_20 = arith.constant dense<0.000000e+00> : vector<16x128xf32>
    %23 = tpu.matmul %21, %22, %cst_20 {dimension_numbers = #tpu.dot_dimension_numbers<[1], [0], [0], [1], [0, 0, 1, 1], [], []>} : vector<16x128xf32>, vector<128x128xf32>, vector<16x128xf32> -> vector<16x128xf32>
    %c0_21 = arith.constant 0 : index
    %c0_22 = arith.constant 0 : index
    %24 = vector.load %arg9[%c0_21, %c0_22] : memref<1x128xf32, #tpu.memory_space<vmem>>, vector<1x128xf32>
    %25 = vector.broadcast %24 : vector<1x128xf32> to vector<16x128xf32>
    %26 = arith.addf %23, %25 : vector<16x128xf32>
    %c0_23 = arith.constant 0 : index
    %c0_24 = arith.constant 0 : index
    %27 = vector.load %arg10[%c0_23, %c0_24] : memref<128x128xf32, #tpu.memory_space<vmem>>, vector<128x128xf32>
    %cst_25 = arith.constant dense<0.000000e+00> : vector<16x128xf32>
    %28 = tpu.matmul %26, %27, %cst_25 {dimension_numbers = #tpu.dot_dimension_numbers<[1], [0], [0], [1], [0, 0, 1, 1], [], []>} : vector<16x128xf32>, vector<128x128xf32>, vector<16x128xf32> -> vector<16x128xf32>
    %c0_26 = arith.constant 0 : index
    %c0_27 = arith.constant 0 : index
    %29 = vector.load %arg11[%c0_26, %c0_27] : memref<1x128xf32, #tpu.memory_space<vmem>>, vector<1x128xf32>
    %30 = vector.broadcast %29 : vector<1x128xf32> to vector<16x128xf32>
    %31 = arith.addf %28, %30 : vector<16x128xf32>
    %cst_28 = arith.constant 0.000000e+00 : f32
    %32 = vector.broadcast %cst_28 : f32 to vector<16x128xf32>
    %33 = arith.maximumf %31, %32 : vector<16x128xf32>
    %c0_29 = arith.constant 0 : index
    %c0_30 = arith.constant 0 : index
    %34 = vector.load %arg12[%c0_29, %c0_30] : memref<128x128xf32, #tpu.memory_space<vmem>>, vector<128x128xf32>
    %cst_31 = arith.constant dense<0.000000e+00> : vector<16x128xf32>
    %35 = tpu.matmul %33, %34, %cst_31 {dimension_numbers = #tpu.dot_dimension_numbers<[1], [0], [0], [1], [0, 0, 1, 1], [], []>} : vector<16x128xf32>, vector<128x128xf32>, vector<16x128xf32> -> vector<16x128xf32>
    %c0_32 = arith.constant 0 : index
    %c0_33 = arith.constant 0 : index
    %36 = vector.load %arg13[%c0_32, %c0_33] : memref<1x128xf32, #tpu.memory_space<vmem>>, vector<1x128xf32>
    %37 = vector.broadcast %36 : vector<1x128xf32> to vector<16x128xf32>
    %38 = arith.addf %35, %37 : vector<16x128xf32>
    %cst_34 = arith.constant 0.000000e+00 : f32
    %39 = vector.broadcast %cst_34 : f32 to vector<16x128xf32>
    %40 = arith.maximumf %38, %39 : vector<16x128xf32>
    %c0_35 = arith.constant 0 : index
    %c0_36 = arith.constant 0 : index
    %41 = vector.load %arg14[%c0_35, %c0_36] : memref<128x128xf32, #tpu.memory_space<vmem>>, vector<128x128xf32>
    %cst_37 = arith.constant dense<0.000000e+00> : vector<16x128xf32>
    %42 = tpu.matmul %40, %41, %cst_37 {dimension_numbers = #tpu.dot_dimension_numbers<[1], [0], [0], [1], [0, 0, 1, 1], [], []>} : vector<16x128xf32>, vector<128x128xf32>, vector<16x128xf32> -> vector<16x128xf32>
    %c0_38 = arith.constant 0 : index
    %c0_39 = arith.constant 0 : index
    %43 = vector.load %arg15[%c0_38, %c0_39] : memref<1x128xf32, #tpu.memory_space<vmem>>, vector<1x128xf32>
    %44 = vector.broadcast %43 : vector<1x128xf32> to vector<16x128xf32>
    %45 = arith.addf %42, %44 : vector<16x128xf32>
    %cst_40 = arith.constant 0.000000e+00 : f32
    %46 = vector.broadcast %cst_40 : f32 to vector<16x128xf32>
    %47 = arith.maximumf %45, %46 : vector<16x128xf32>
    %c0_41 = arith.constant 0 : index
    %c0_42 = arith.constant 0 : index
    %48 = vector.load %arg16[%c0_41, %c0_42] : memref<128x128xf32, #tpu.memory_space<vmem>>, vector<128x128xf32>
    %cst_43 = arith.constant dense<0.000000e+00> : vector<16x128xf32>
    %49 = tpu.matmul %47, %48, %cst_43 {dimension_numbers = #tpu.dot_dimension_numbers<[1], [0], [0], [1], [0, 0, 1, 1], [], []>} : vector<16x128xf32>, vector<128x128xf32>, vector<16x128xf32> -> vector<16x128xf32>
    %c0_44 = arith.constant 0 : index
    %c0_45 = arith.constant 0 : index
    %50 = vector.load %arg17[%c0_44, %c0_45] : memref<1x128xf32, #tpu.memory_space<vmem>>, vector<1x128xf32>
    %51 = vector.broadcast %50 : vector<1x128xf32> to vector<16x128xf32>
    %52 = arith.addf %49, %51 : vector<16x128xf32>
    %53 = arith.addf %26, %52 : vector<16x128xf32>
    %c0_46 = arith.constant 0 : index
    %c0_47 = arith.constant 0 : index
    %54 = vector.load %arg18[%c0_46, %c0_47] : memref<16x128xf32, #tpu.memory_space<vmem>>, vector<16x128xf32>
    tpu.vector_store %arg18[%c0_46, %c0_47], %53 {strides = array<i32>} : memref<16x128xf32, #tpu.memory_space<vmem>>, vector<16x128xf32>,
    return
  }
  func.func @transform_0(%arg0: i32) -> (i32, i32) {
    %c0_i32 = arith.constant 0 : i32
    %c0_i32_0 = arith.constant 0 : i32
    return %arg0, %c0_i32 : i32, i32
  }
  func.func @transform_1(%arg0: i32) -> (i32, i32) {
    %c0_i32 = arith.constant 0 : i32
    %c0_i32_0 = arith.constant 0 : i32
    %c0_i32_1 = arith.constant 0 : i32
    return %c0_i32, %c0_i32_0 : i32, i32
  }
  func.func @transform_2(%arg0: i32) -> (i32, i32) {
    %c0_i32 = arith.constant 0 : i32
    %c0_i32_0 = arith.constant 0 : i32
    %c0_i32_1 = arith.constant 0 : i32
    return %c0_i32, %c0_i32_0 : i32, i32
  }
  func.func @transform_3(%arg0: i32) -> (i32, i32) {
    %c0_i32 = arith.constant 0 : i32
    %c0_i32_0 = arith.constant 0 : i32
    %c0_i32_1 = arith.constant 0 : i32
    return %c0_i32, %c0_i32_0 : i32, i32
  }
  func.func @transform_4(%arg0: i32) -> (i32, i32) {
    %c0_i32 = arith.constant 0 : i32
    %c0_i32_0 = arith.constant 0 : i32
    %c0_i32_1 = arith.constant 0 : i32
    return %c0_i32, %c0_i32_0 : i32, i32
  }
  func.func @transform_5(%arg0: i32) -> (i32, i32) {
    %c0_i32 = arith.constant 0 : i32
    %c0_i32_0 = arith.constant 0 : i32
    %c0_i32_1 = arith.constant 0 : i32
    return %c0_i32, %c0_i32_0 : i32, i32
  }
  func.func @transform_6(%arg0: i32) -> (i32, i32) {
    %c0_i32 = arith.constant 0 : i32
    %c0_i32_0 = arith.constant 0 : i32
    %c0_i32_1 = arith.constant 0 : i32
    return %c0_i32, %c0_i32_0 : i32, i32
  }
  func.func @transform_7(%arg0: i32) -> (i32, i32) {
    %c0_i32 = arith.constant 0 : i32
    %c0_i32_0 = arith.constant 0 : i32
    %c0_i32_1 = arith.constant 0 : i32
    return %c0_i32, %c0_i32_0 : i32, i32
  }
  func.func @transform_8(%arg0: i32) -> (i32, i32) {
    %c0_i32 = arith.constant 0 : i32
    %c0_i32_0 = arith.constant 0 : i32
    %c0_i32_1 = arith.constant 0 : i32
    return %c0_i32, %c0_i32_0 : i32, i32
  }
  func.func @transform_9(%arg0: i32) -> (i32, i32) {
    %c0_i32 = arith.constant 0 : i32
    %c0_i32_0 = arith.constant 0 : i32
    %c0_i32_1 = arith.constant 0 : i32
    return %c0_i32, %c0_i32_0 : i32, i32
  }
  func.func @transform_10(%arg0: i32) -> (i32, i32) {
    %c0_i32 = arith.constant 0 : i32
    %c0_i32_0 = arith.constant 0 : i32
    %c0_i32_1 = arith.constant 0 : i32
    return %c0_i32, %c0_i32_0 : i32, i32
  }
  func.func @transform_11(%arg0: i32) -> (i32, i32) {
    %c0_i32 = arith.constant 0 : i32
    %c0_i32_0 = arith.constant 0 : i32
    %c0_i32_1 = arith.constant 0 : i32
    return %c0_i32, %c0_i32_0 : i32, i32
  }
  func.func @transform_12(%arg0: i32) -> (i32, i32) {
    %c0_i32 = arith.constant 0 : i32
    %c0_i32_0 = arith.constant 0 : i32
    %c0_i32_1 = arith.constant 0 : i32
    return %c0_i32, %c0_i32_0 : i32, i32
  }
  func.func @transform_13(%arg0: i32) -> (i32, i32) {
    %c0_i32 = arith.constant 0 : i32
    %c0_i32_0 = arith.constant 0 : i32
    %c0_i32_1 = arith.constant 0 : i32
    return %c0_i32, %c0_i32_0 : i32, i32
  }
  func.func @transform_14(%arg0: i32) -> (i32, i32) {
    %c0_i32 = arith.constant 0 : i32
    %c0_i32_0 = arith.constant 0 : i32
    %c0_i32_1 = arith.constant 0 : i32
    return %c0_i32, %c0_i32_0 : i32, i32
  }
  func.func @transform_15(%arg0: i32) -> (i32, i32) {
    %c0_i32 = arith.constant 0 : i32
    %c0_i32_0 = arith.constant 0 : i32
    %c0_i32_1 = arith.constant 0 : i32
    return %c0_i32, %c0_i32_0 : i32, i32
  }
  func.func @transform_16(%arg0: i32) -> (i32, i32) {
    %c0_i32 = arith.constant 0 : i32
    %c0_i32_0 = arith.constant 0 : i32
    %c0_i32_1 = arith.constant 0 : i32
    return %c0_i32, %c0_i32_0 : i32, i32
  }
  func.func @transform_17(%arg0: i32) -> (i32, i32) {
    %c0_i32 = arith.constant 0 : i32
    %c0_i32_0 = arith.constant 0 : i32
    return %arg0, %c0_i32 : i32, i32
  }
}

</mosaic_0001>

<llo_original>
// kernel: tpu_custom_call.1
$region0: #{tpu_custom_call.1}
  #allocation0 [shape = 'u32[]', space=smem, size = 0x4, offset = 0x4, fixed_abs, tag = 'smem constant byte address 0x4 - core index']
  #allocation1 [shape = 'u32[72,128]{1,0:T(1,128)}', space=vmem, size = 0x9000, scoped, tag = 'internal scratch']
  %s0 = inlined_call_operand.hbm [shape: f32[16,128], index: 0, kind: input, shape index: {}]
  %s1 = inlined_call_operand.hbm [shape: f32[128,128], index: 1, kind: input, shape index: {}]
  %s2 = inlined_call_operand.vmem [shape: f32[1,128], index: 2, kind: input, shape index: {}]
  %s3 = inlined_call_operand.hbm [shape: f32[128,128], index: 3, kind: input, shape index: {}]
  %s4 = inlined_call_operand.vmem [shape: f32[1,128], index: 4, kind: input, shape index: {}]
  %s5 = inlined_call_operand.hbm [shape: f32[128,128], index: 5, kind: input, shape index: {}]
  %s6 = inlined_call_operand.vmem [shape: f32[1,128], index: 6, kind: input, shape index: {}]
  %s7 = inlined_call_operand.hbm [shape: f32[128,128], index: 7, kind: input, shape index: {}]
  %s8 = inlined_call_operand.vmem [shape: f32[1,128], index: 8, kind: input, shape index: {}]
  %s9 = inlined_call_operand.hbm [shape: f32[128,128], index: 9, kind: input, shape index: {}]
  %s10 = inlined_call_operand.vmem [shape: f32[1,128], index: 10, kind: input, shape index: {}]
  %s11 = inlined_call_operand.hbm [shape: f32[128,128], index: 11, kind: input, shape index: {}]
  %s12 = inlined_call_operand.vmem [shape: f32[1,128], index: 12, kind: input, shape index: {}]
  %s13 = inlined_call_operand.hbm [shape: f32[128,128], index: 13, kind: input, shape index: {}]
  %s14 = inlined_call_operand.vmem [shape: f32[1,128], index: 14, kind: input, shape index: {}]
  %s15 = inlined_call_operand.hbm [shape: f32[128,128], index: 15, kind: input, shape index: {}]
  %s16 = inlined_call_operand.vmem [shape: f32[1,128], index: 16, kind: input, shape index: {}]
  %s17 = inlined_call_operand.hbm [shape: f32[16,128], index: 17, kind: output, shape index: {}]
  %s18 = sld [smem:[#allocation0]]
  $region114: #{tpu_custom_call.1} parent=0
    _
  %s20 = ssub.s32 1, %s18
  %s21 = scalar_select 0, %s20, %s18
  $region1: #{tpu_custom_call.1} parent=0
    #allocation2 [shape = 'u8[8192]{0}', space=vmem, size = 0x2000, scoped, tag = 'input window, operand 0, single buffered']
    #allocation3 [shape = 's32[1]{0}', space=sflag, size = 0x4, scoped, tag = 'scoped memory for tpu_custom_call.1']
    #allocation4 [shape = 's32[1]{0}', space=sflag, size = 0x4, scoped, tag = 'scoped memory for tpu_custom_call.1']
    #allocation5 [shape = 'u8[65536]{0}', space=vmem, size = 0x10000, scoped, tag = 'input window, operand 1, single buffered']
    #allocation6 [shape = 's32[1]{0}', space=sflag, size = 0x4, scoped, tag = 'scoped memory for tpu_custom_call.1']
    #allocation7 [shape = 'u8[65536]{0}', space=vmem, size = 0x10000, scoped, tag = 'input window, operand 3, single buffered']
    #allocation8 [shape = 'u8[65536]{0}', space=vmem, size = 0x10000, scoped, tag = 'input window, operand 5, single buffered']
    #allocation9 [shape = 's32[1]{0}', space=sflag, size = 0x4, scoped, tag = 'scoped memory for tpu_custom_call.1']
    #allocation10 [shape = 'u8[65536]{0}', space=vmem, size = 0x10000, scoped, tag = 'input window, operand 7, single buffered']
    #allocation11 [shape = 'u8[65536]{0}', space=vmem, size = 0x10000, scoped, tag = 'input window, operand 9, single buffered']
    #allocation12 [shape = 's32[1]{0}', space=sflag, size = 0x4, scoped, tag = 'scoped memory for tpu_custom_call.1']
    #allocation13 [shape = 'u8[65536]{0}', space=vmem, size = 0x10000, scoped, tag = 'input window, operand 11, single buffered']
    #allocation14 [shape = 'u8[65536]{0}', space=vmem, size = 0x10000, scoped, tag = 'input window, operand 13, single buffered']
    #allocation15 [shape = 's32[1]{0}', space=sflag, size = 0x4, scoped, tag = 'scoped memory for tpu_custom_call.1']
    #allocation16 [shape = 'u8[65536]{0}', space=vmem, size = 0x10000, scoped, tag = 'input window, operand 15, single buffered']
    #allocation17 [shape = 'u8[8192]{0}', space=vmem, size = 0x2000, scoped, tag = 'output window, operand 0, single buffered']
    %22 = vsyncpa [#allocation3], 0
    %23 = vsyncpa [#allocation6], 0
    %24 = vsyncpa [#allocation9], 0
    %25 = vsyncpa [#allocation12], 0
    %26 = vsyncpa [#allocation15], 0
    %27 = vsyncpa [#allocation4], 0
    // Predicated region
    $region2: #{tpu_custom_call.1} parent=1 // pred_check
      _
    $region3: #{tpu_custom_call.1} parent=1 // pred_check_branch
      %29 = sbr.rel (0) target = $region5
    $region4: #{tpu_custom_call.1} parent=1 // pred_region
      %31 = vsyncadd [#allocation3], 0
      %s32 = sshll.u32 %s0, 4
      %s33 = int_to_ptr.hbm [resolvable:$true] %s32
      %s34 = sshll.u32 [#allocation2], 4
      %s35 = int_to_ptr.vmem [resolvable:$true] %s34
      %40 = dma.hbm_to_vmem [thread:$0]  %s33, 256, %s35, [#allocation3], 128, 128, 8
    $region5: #{tpu_custom_call.1} parent=1 // pred_fallthru
      _
    // Predicated region
    $region6: #{tpu_custom_call.1} parent=1 // pred_check
      _
    $region7: #{tpu_custom_call.1} parent=1 // pred_check_branch
      %42 = sbr.rel (0) target = $region9
    $region8: #{tpu_custom_call.1} parent=1 // pred_region
      %44 = vsyncadd [#allocation6], 0
      %s45 = sshll.u32 %s1, 4
      %s46 = int_to_ptr.hbm [resolvable:$true] %s45
      %s47 = sshll.u32 [#allocation5], 4
      %s48 = int_to_ptr.vmem [resolvable:$true] %s47
      %53 = dma.hbm_to_vmem [thread:$0]  %s46, 2048, %s48, [#allocation6], 128, 128, 8
    $region9: #{tpu_custom_call.1} parent=1 // pred_fallthru
      _
    // Predicated region
    $region10: #{tpu_custom_call.1} parent=1 // pred_check
      _
    $region11: #{tpu_custom_call.1} parent=1 // pred_check_branch
      %55 = sbr.rel (0) target = $region13
    $region12: #{tpu_custom_call.1} parent=1 // pred_region
      _
    $region13: #{tpu_custom_call.1} parent=1 // pred_fallthru
      _
    // Predicated region
    $region14: #{tpu_custom_call.1} parent=1 // pred_check
      _
    $region15: #{tpu_custom_call.1} parent=1 // pred_check_branch
      %57 = sbr.rel (0) target = $region17
    $region16: #{tpu_custom_call.1} parent=1 // pred_region
      %59 = vsyncadd [#allocation6], 0
      %s60 = sshll.u32 %s3, 4
      %s61 = int_to_ptr.hbm [resolvable:$true] %s60
      %s62 = sshll.u32 [#allocation7], 4
      %s63 = int_to_ptr.vmem [resolvable:$true] %s62
      %68 = dma.hbm_to_vmem [thread:$0]  %s61, 2048, %s63, [#allocation6], 128, 128, 8
    $region17: #{tpu_custom_call.1} parent=1 // pred_fallthru
      _
    // Predicated region
    $region18: #{tpu_custom_call.1} parent=1 // pred_check
      _
    $region19: #{tpu_custom_call.1} parent=1 // pred_check_branch
      %70 = sbr.rel (0) target = $region21
    $region20: #{tpu_custom_call.1} parent=1 // pred_region
      _
    $region21: #{tpu_custom_call.1} parent=1 // pred_fallthru
      _
    // Predicated region
    $region22: #{tpu_custom_call.1} parent=1 // pred_check
      _
    $region23: #{tpu_custom_call.1} parent=1 // pred_check_branch
      %72 = sbr.rel (0) target = $region25
    $region24: #{tpu_custom_call.1} parent=1 // pred_region
      %74 = vsyncadd [#allocation9], 0
      %s75 = sshll.u32 %s5, 4
      %s76 = int_to_ptr.hbm [resolvable:$true] %s75
      %s77 = sshll.u32 [#allocation8], 4
      %s78 = int_to_ptr.vmem [resolvable:$true] %s77
      %83 = dma.hbm_to_vmem [thread:$0]  %s76, 2048, %s78, [#allocation9], 128, 128, 8
    $region25: #{tpu_custom_call.1} parent=1 // pred_fallthru
      _
    // Predicated region
    $region26: #{tpu_custom_call.1} parent=1 // pred_check
      _
    $region27: #{tpu_custom_call.1} parent=1 // pred_check_branch
      %85 = sbr.rel (0) target = $region29
    $region28: #{tpu_custom_call.1} parent=1 // pred_region
      _
    $region29: #{tpu_custom_call.1} parent=1 // pred_fallthru
      _
    // Predicated region
    $region30: #{tpu_custom_call.1} parent=1 // pred_check
      _
    $region31: #{tpu_custom_call.1} parent=1 // pred_check_branch
      %87 = sbr.rel (0) target = $region33
    $region32: #{tpu_custom_call.1} parent=1 // pred_region
      %89 = vsyncadd [#allocation9], 0
      %s90 = sshll.u32 %s7, 4
      %s91 = int_to_ptr.hbm [resolvable:$true] %s90
      %s92 = sshll.u32 [#allocation10], 4
      %s93 = int_to_ptr.vmem [resolvable:$true] %s92
      %98 = dma.hbm_to_vmem [thread:$0]  %s91, 2048, %s93, [#allocation9], 128, 128, 8
    $region33: #{tpu_custom_call.1} parent=1 // pred_fallthru
      _
    // Predicated region
    $region34: #{tpu_custom_call.1} parent=1 // pred_check
      _
    $region35: #{tpu_custom_call.1} parent=1 // pred_check_branch
      %100 = sbr.rel (0) target = $region37
    $region36: #{tpu_custom_call.1} parent=1 // pred_region
      _
    $region37: #{tpu_custom_call.1} parent=1 // pred_fallthru
      _
    // Predicated region
    $region38: #{tpu_custom_call.1} parent=1 // pred_check
      _
    $region39: #{tpu_custom_call.1} parent=1 // pred_check_branch
      %102 = sbr.rel (0) target = $region41
    $region40: #{tpu_custom_call.1} parent=1 // pred_region
      %104 = vsyncadd [#allocation12], 0
      %s105 = sshll.u32 %s9, 4
      %s106 = int_to_ptr.hbm [resolvable:$true] %s105
      %s107 = sshll.u32 [#allocation11], 4
      %s108 = int_to_ptr.vmem [resolvable:$true] %s107
      %113 = dma.hbm_to_vmem [thread:$0]  %s106, 2048, %s108, [#allocation12], 128, 128, 8
    $region41: #{tpu_custom_call.1} parent=1 // pred_fallthru
      _
    // Predicated region
    $region42: #{tpu_custom_call.1} parent=1 // pred_check
      _
    $region43: #{tpu_custom_call.1} parent=1 // pred_check_branch
      %115 = sbr.rel (0) target = $region45
    $region44: #{tpu_custom_call.1} parent=1 // pred_region
      _
    $region45: #{tpu_custom_call.1} parent=1 // pred_fallthru
      _
    // Predicated region
    $region46: #{tpu_custom_call.1} parent=1 // pred_check
      _
    $region47: #{tpu_custom_call.1} parent=1 // pred_check_branch
      %117 = sbr.rel (0) target = $region49
    $region48: #{tpu_custom_call.1} parent=1 // pred_region
      %119 = vsyncadd [#allocation12], 0
      %s120 = sshll.u32 %s11, 4
      %s121 = int_to_ptr.hbm [resolvable:$true] %s120
      %s122 = sshll.u32 [#allocation13], 4
      %s123 = int_to_ptr.vmem [resolvable:$true] %s122
      %128 = dma.hbm_to_vmem [thread:$0]  %s121, 2048, %s123, [#allocation12], 128, 128, 8
    $region49: #{tpu_custom_call.1} parent=1 // pred_fallthru
      _
    // Predicated region
    $region50: #{tpu_custom_call.1} parent=1 // pred_check
      _
    $region51: #{tpu_custom_call.1} parent=1 // pred_check_branch
      %130 = sbr.rel (0) target = $region53
    $region52: #{tpu_custom_call.1} parent=1 // pred_region
      _
    $region53: #{tpu_custom_call.1} parent=1 // pred_fallthru
      _
    // Predicated region
    $region54: #{tpu_custom_call.1} parent=1 // pred_check
      _
    $region55: #{tpu_custom_call.1} parent=1 // pred_check_branch
      %132 = sbr.rel (0) target = $region57
    $region56: #{tpu_custom_call.1} parent=1 // pred_region
      %134 = vsyncadd [#allocation15], 0
      %s135 = sshll.u32 %s13, 4
      %s136 = int_to_ptr.hbm [resolvable:$true] %s135
      %s137 = sshll.u32 [#allocation14], 4
      %s138 = int_to_ptr.vmem [resolvable:$true] %s137
      %143 = dma.hbm_to_vmem [thread:$0]  %s136, 2048, %s138, [#allocation15], 128, 128, 8
    $region57: #{tpu_custom_call.1} parent=1 // pred_fallthru
      _
    // Predicated region
    $region58: #{tpu_custom_call.1} parent=1 // pred_check
      _
    $region59: #{tpu_custom_call.1} parent=1 // pred_check_branch
      %145 = sbr.rel (0) target = $region61
    $region60: #{tpu_custom_call.1} parent=1 // pred_region
      _
    $region61: #{tpu_custom_call.1} parent=1 // pred_fallthru
      _
    // Predicated region
    $region62: #{tpu_custom_call.1} parent=1 // pred_check
      _
    $region63: #{tpu_custom_call.1} parent=1 // pred_check_branch
      %147 = sbr.rel (0) target = $region65
    $region64: #{tpu_custom_call.1} parent=1 // pred_region
      %149 = vsyncadd [#allocation15], 0
      %s150 = sshll.u32 %s15, 4
      %s151 = int_to_ptr.hbm [resolvable:$true] %s150
      %s152 = sshll.u32 [#allocation16], 4
      %s153 = int_to_ptr.vmem [resolvable:$true] %s152
      %158 = dma.hbm_to_vmem [thread:$0]  %s151, 2048, %s153, [#allocation15], 128, 128, 8
    $region65: #{tpu_custom_call.1} parent=1 // pred_fallthru
      _
    // Predicated region
    $region66: #{tpu_custom_call.1} parent=1 // pred_check
      _
    $region67: #{tpu_custom_call.1} parent=1 // pred_check_branch
      %160 = sbr.rel (0) target = $region69
    $region68: #{tpu_custom_call.1} parent=1 // pred_region
      _
    $region69: #{tpu_custom_call.1} parent=1 // pred_fallthru
      _
    // Predicated region
    $region70: #{tpu_custom_call.1} parent=1 // pred_check
      _
    $region71: #{tpu_custom_call.1} parent=1 // pred_check_branch
      %162 = sbr.rel (0) target = $region73
    $region72: #{tpu_custom_call.1} parent=1 // pred_region
      %164 = dma.done [#allocation3], 256
    $region73: #{tpu_custom_call.1} parent=1 // pred_fallthru
      _
    // Predicated region
    $region74: #{tpu_custom_call.1} parent=1 // pred_check
      _
    $region75: #{tpu_custom_call.1} parent=1 // pred_check_branch
      %166 = sbr.rel (0) target = $region77
    $region76: #{tpu_custom_call.1} parent=1 // pred_region
      %168 = dma.done [#allocation6], 2048
    $region77: #{tpu_custom_call.1} parent=1 // pred_fallthru
      _
    // Predicated region
    $region78: #{tpu_custom_call.1} parent=1 // pred_check
      _
    $region79: #{tpu_custom_call.1} parent=1 // pred_check_branch
      %170 = sbr.rel (0) target = $region81
    $region80: #{tpu_custom_call.1} parent=1 // pred_region
      %172 = dma.done [#allocation6], 2048
    $region81: #{tpu_custom_call.1} parent=1 // pred_fallthru
      _
    // Predicated region
    $region82: #{tpu_custom_call.1} parent=1 // pred_check
      _
    $region83: #{tpu_custom_call.1} parent=1 // pred_check_branch
      %174 = sbr.rel (0) target = $region85
    $region84: #{tpu_custom_call.1} parent=1 // pred_region
      %176 = dma.done [#allocation9], 2048
    $region85: #{tpu_custom_call.1} parent=1 // pred_fallthru
      _
    // Predicated region
    $region86: #{tpu_custom_call.1} parent=1 // pred_check
      _
    $region87: #{tpu_custom_call.1} parent=1 // pred_check_branch
      %178 = sbr.rel (0) target = $region89
    $region88: #{tpu_custom_call.1} parent=1 // pred_region
      %180 = dma.done [#allocation9], 2048
    $region89: #{tpu_custom_call.1} parent=1 // pred_fallthru
      _
    // Predicated region
    $region90: #{tpu_custom_call.1} parent=1 // pred_check
      _
    $region91: #{tpu_custom_call.1} parent=1 // pred_check_branch
      %182 = sbr.rel (0) target = $region93
    $region92: #{tpu_custom_call.1} parent=1 // pred_region
      %184 = dma.done [#allocation12], 2048
    $region93: #{tpu_custom_call.1} parent=1 // pred_fallthru
      _
    // Predicated region
    $region94: #{tpu_custom_call.1} parent=1 // pred_check
      _
    $region95: #{tpu_custom_call.1} parent=1 // pred_check_branch
      %186 = sbr.rel (0) target = $region97
    $region96: #{tpu_custom_call.1} parent=1 // pred_region
      %188 = dma.done [#allocation12], 2048
    $region97: #{tpu_custom_call.1} parent=1 // pred_fallthru
      _
    // Predicated region
    $region98: #{tpu_custom_call.1} parent=1 // pred_check
      _
    $region99: #{tpu_custom_call.1} parent=1 // pred_check_branch
      %190 = sbr.rel (0) target = $region101
    $region100: #{tpu_custom_call.1} parent=1 // pred_region
      %192 = dma.done [#allocation15], 2048
    $region101: #{tpu_custom_call.1} parent=1 // pred_fallthru
      _
    // Predicated region
    $region102: #{tpu_custom_call.1} parent=1 // pred_check
      _
    $region103: #{tpu_custom_call.1} parent=1 // pred_check_branch
      %194 = sbr.rel (0) target = $region105
    $region104: #{tpu_custom_call.1} parent=1 // pred_region
      %196 = dma.done [#allocation15], 2048
    $region105: #{tpu_custom_call.1} parent=1 // pred_fallthru
      _
    %v197 = vld [vmem:[#allocation2] sm:$0xff]
    %v198 = vld [vmem:[#allocation2 + $0x8] sm:$0xff]
    %v199 = vld [vmem:[#allocation5] sm:$0xff]
    %v200 = vld [vmem:[#allocation5 + $0x8] sm:$0xff]
    %v201 = vld [vmem:[#allocation5 + $0x10] sm:$0xff]
    %v202 = vld [vmem:[#allocation5 + $0x18] sm:$0xff]
    %v203 = vld [vmem:[#allocation5 + $0x20] sm:$0xff]
    %v204 = vld [vmem:[#allocation5 + $0x28] sm:$0xff]
    %v205 = vld [vmem:[#allocation5 + $0x30] sm:$0xff]
    %v206 = vld [vmem:[#allocation5 + $0x38] sm:$0xff]
    %v207 = vld [vmem:[#allocation5 + $0x40] sm:$0xff]
    %v208 = vld [vmem:[#allocation5 + $0x48] sm:$0xff]
    %v209 = vld [vmem:[#allocation5 + $0x50] sm:$0xff]
    %v210 = vld [vmem:[#allocation5 + $0x58] sm:$0xff]
    %v211 = vld [vmem:[#allocation5 + $0x60] sm:$0xff]
    %v212 = vld [vmem:[#allocation5 + $0x68] sm:$0xff]
    %v213 = vld [vmem:[#allocation5 + $0x70] sm:$0xff]
    %v214 = vld [vmem:[#allocation5 + $0x78] sm:$0xff]
    %v215 = vld [vmem:[%s2] sm:$0x1]
    %v217 = vperm.slane %v215, 0
    %219 = vmatpush.msra.mxu0 %v214
    %220 = vmatpush.msra.mxu0 %v213
    %221 = vmatpush.msra.mxu0 %v212
    %222 = vmatpush.msra.mxu0 %v211
    %223 = vmatpush.msra.mxu0 %v210
    %224 = vmatpush.msra.mxu0 %v209
    %225 = vmatpush.msra.mxu0 %v208
    %226 = vmatpush.msra.mxu0 %v207
    %227 = vmatpush.msra.mxu0 %v206
    %228 = vmatpush.msra.mxu0 %v205
    %229 = vmatpush.msra.mxu0 %v204
    %230 = vmatpush.msra.mxu0 %v203
    %231 = vmatpush.msra.mxu0 %v202
    %232 = vmatpush.msra.mxu0 %v201
    %233 = vmatpush.msra.mxu0 %v200
    %234 = vmatpush.msra.mxu0 %v199
    %235 = vmatmul.f32.gmra.mxu0 %v197
    %v236 = vpop.f32.mrf.mxu0
    %v237 = vadd.f32 %v217, %v236
    %238 = vmatmul.f32.gmra.mxu0 %v198
    %v239 = vpop.f32.mrf.mxu0
    %v240 = vadd.f32 %v217, %v239
    %241 = vdwg.mxu0
    %v242 = vmax.f32 %v237, 0.0
    %v243 = vmax.f32 %v240, 0.0
    %v244 = vld [vmem:[#allocation7] sm:$0xff]
    %v245 = vld [vmem:[#allocation7 + $0x8] sm:$0xff]
    %v246 = vld [vmem:[#allocation7 + $0x10] sm:$0xff]
    %v247 = vld [vmem:[#allocation7 + $0x18] sm:$0xff]
    %v248 = vld [vmem:[#allocation7 + $0x20] sm:$0xff]
    %v249 = vld [vmem:[#allocation7 + $0x28] sm:$0xff]
    %v250 = vld [vmem:[#allocation7 + $0x30] sm:$0xff]
    %v251 = vld [vmem:[#allocation7 + $0x38] sm:$0xff]
    %v252 = vld [vmem:[#allocation7 + $0x40] sm:$0xff]
    %v253 = vld [vmem:[#allocation7 + $0x48] sm:$0xff]
    %v254 = vld [vmem:[#allocation7 + $0x50] sm:$0xff]
    %v255 = vld [vmem:[#allocation7 + $0x58] sm:$0xff]
    %v256 = vld [vmem:[#allocation7 + $0x60] sm:$0xff]
    %v257 = vld [vmem:[#allocation7 + $0x68] sm:$0xff]
    %v258 = vld [vmem:[#allocation7 + $0x70] sm:$0xff]
    %v259 = vld [vmem:[#allocation7 + $0x78] sm:$0xff]
    %v260 = vld [vmem:[%s4] sm:$0x1]
    %v262 = vperm.slane %v260, 0
    %264 = vmatpush.msra.mxu0 %v259
    %265 = vmatpush.msra.mxu0 %v258
    %266 = vmatpush.msra.mxu0 %v257
    %267 = vmatpush.msra.mxu0 %v256
    %268 = vmatpush.msra.mxu0 %v255
    %269 = vmatpush.msra.mxu0 %v254
    %270 = vmatpush.msra.mxu0 %v253
    %271 = vmatpush.msra.mxu0 %v252
    %272 = vmatpush.msra.mxu0 %v251
    %273 = vmatpush.msra.mxu0 %v250
    %274 = vmatpush.msra.mxu0 %v249
    %275 = vmatpush.msra.mxu0 %v248
    %276 = vmatpush.msra.mxu0 %v247
    %277 = vmatpush.msra.mxu0 %v246
    %278 = vmatpush.msra.mxu0 %v245
    %279 = vmatpush.msra.mxu0 %v244
    %280 = vmatmul.f32.gmra.mxu0 %v242
    %v281 = vpop.f32.mrf.mxu0
    %v282 = vadd.f32 %v262, %v281
    %283 = vmatmul.f32.gmra.mxu0 %v243
    %v284 = vpop.f32.mrf.mxu0
    %v285 = vadd.f32 %v262, %v284
    %286 = vdwg.mxu0
    %v287 = vmax.f32 %v282, 0.0
    %v288 = vmax.f32 %v285, 0.0
    %v289 = vld [vmem:[#allocation8] sm:$0xff]
    %v290 = vld [vmem:[#allocation8 + $0x8] sm:$0xff]
    %v291 = vld [vmem:[#allocation8 + $0x10] sm:$0xff]
    %v292 = vld [vmem:[#allocation8 + $0x18] sm:$0xff]
    %v293 = vld [vmem:[#allocation8 + $0x20] sm:$0xff]
    %v294 = vld [vmem:[#allocation8 + $0x28] sm:$0xff]
    %v295 = vld [vmem:[#allocation8 + $0x30] sm:$0xff]
    %v296 = vld [vmem:[#allocation8 + $0x38] sm:$0xff]
    %v297 = vld [vmem:[#allocation8 + $0x40] sm:$0xff]
    %v298 = vld [vmem:[#allocation8 + $0x48] sm:$0xff]
    %v299 = vld [vmem:[#allocation8 + $0x50] sm:$0xff]
    %v300 = vld [vmem:[#allocation8 + $0x58] sm:$0xff]
    %v301 = vld [vmem:[#allocation8 + $0x60] sm:$0xff]
    %v302 = vld [vmem:[#allocation8 + $0x68] sm:$0xff]
    %v303 = vld [vmem:[#allocation8 + $0x70] sm:$0xff]
    %v304 = vld [vmem:[#allocation8 + $0x78] sm:$0xff]
    %v305 = vld [vmem:[%s6] sm:$0x1]
    %v307 = vperm.slane %v305, 0
    %309 = vmatpush.msra.mxu0 %v304
    %310 = vmatpush.msra.mxu0 %v303
    %311 = vmatpush.msra.mxu0 %v302
    %312 = vmatpush.msra.mxu0 %v301
    %313 = vmatpush.msra.mxu0 %v300
    %314 = vmatpush.msra.mxu0 %v299
    %315 = vmatpush.msra.mxu0 %v298
    %316 = vmatpush.msra.mxu0 %v297
    %317 = vmatpush.msra.mxu0 %v296
    %318 = vmatpush.msra.mxu0 %v295
    %319 = vmatpush.msra.mxu0 %v294
    %320 = vmatpush.msra.mxu0 %v293
    %321 = vmatpush.msra.mxu0 %v292
    %322 = vmatpush.msra.mxu0 %v291
    %323 = vmatpush.msra.mxu0 %v290
    %324 = vmatpush.msra.mxu0 %v289
    %325 = vmatmul.f32.gmra.mxu0 %v287
    %v326 = vpop.f32.mrf.mxu0
    %v327 = vadd.f32 %v307, %v326
    %328 = vmatmul.f32.gmra.mxu0 %v288
    %v329 = vpop.f32.mrf.mxu0
    %v330 = vadd.f32 %v307, %v329
    %331 = vdwg.mxu0
    %v332 = vmax.f32 %v327, 0.0
    %v333 = vmax.f32 %v330, 0.0
    %v334 = vld [vmem:[#allocation10] sm:$0xff]
    %v335 = vld [vmem:[#allocation10 + $0x8] sm:$0xff]
    %v336 = vld [vmem:[#allocation10 + $0x10] sm:$0xff]
    %v337 = vld [vmem:[#allocation10 + $0x18] sm:$0xff]
    %v338 = vld [vmem:[#allocation10 + $0x20] sm:$0xff]
    %v339 = vld [vmem:[#allocation10 + $0x28] sm:$0xff]
    %v340 = vld [vmem:[#allocation10 + $0x30] sm:$0xff]
    %v341 = vld [vmem:[#allocation10 + $0x38] sm:$0xff]
    %v342 = vld [vmem:[#allocation10 + $0x40] sm:$0xff]
    %v343 = vld [vmem:[#allocation10 + $0x48] sm:$0xff]
    %v344 = vld [vmem:[#allocation10 + $0x50] sm:$0xff]
    %v345 = vld [vmem:[#allocation10 + $0x58] sm:$0xff]
    %v346 = vld [vmem:[#allocation10 + $0x60] sm:$0xff]
    %v347 = vld [vmem:[#allocation10 + $0x68] sm:$0xff]
    %v348 = vld [vmem:[#allocation10 + $0x70] sm:$0xff]
    %v349 = vld [vmem:[#allocation10 + $0x78] sm:$0xff]
    %v350 = vld [vmem:[%s8] sm:$0x1]
    %v352 = vperm.slane %v350, 0
    %354 = vmatpush.msra.mxu0 %v349
    %355 = vmatpush.msra.mxu0 %v348
    %356 = vmatpush.msra.mxu0 %v347
    %357 = vmatpush.msra.mxu0 %v346
    %358 = vmatpush.msra.mxu0 %v345
    %359 = vmatpush.msra.mxu0 %v344
    %360 = vmatpush.msra.mxu0 %v343
    %361 = vmatpush.msra.mxu0 %v342
    %362 = vmatpush.msra.mxu0 %v341
    %363 = vmatpush.msra.mxu0 %v340
    %364 = vmatpush.msra.mxu0 %v339
    %365 = vmatpush.msra.mxu0 %v338
    %366 = vmatpush.msra.mxu0 %v337
    %367 = vmatpush.msra.mxu0 %v336
    %368 = vmatpush.msra.mxu0 %v335
    %369 = vmatpush.msra.mxu0 %v334
    %370 = vmatmul.f32.gmra.mxu0 %v332
    %v371 = vpop.f32.mrf.mxu0
    %v372 = vadd.f32 %v352, %v371
    %373 = vmatmul.f32.gmra.mxu0 %v333
    %v374 = vpop.f32.mrf.mxu0
    %v375 = vadd.f32 %v352, %v374
    %376 = vdwg.mxu0
    %v377 = vld [vmem:[#allocation11] sm:$0xff]
    %v378 = vld [vmem:[#allocation11 + $0x8] sm:$0xff]
    %v379 = vld [vmem:[#allocation11 + $0x10] sm:$0xff]
    %v380 = vld [vmem:[#allocation11 + $0x18] sm:$0xff]
    %v381 = vld [vmem:[#allocation11 + $0x20] sm:$0xff]
    %v382 = vld [vmem:[#allocation11 + $0x28] sm:$0xff]
    %v383 = vld [vmem:[#allocation11 + $0x30] sm:$0xff]
    %v384 = vld [vmem:[#allocation11 + $0x38] sm:$0xff]
    %v385 = vld [vmem:[#allocation11 + $0x40] sm:$0xff]
    %v386 = vld [vmem:[#allocation11 + $0x48] sm:$0xff]
    %v387 = vld [vmem:[#allocation11 + $0x50] sm:$0xff]
    %v388 = vld [vmem:[#allocation11 + $0x58] sm:$0xff]
    %v389 = vld [vmem:[#allocation11 + $0x60] sm:$0xff]
    %v390 = vld [vmem:[#allocation11 + $0x68] sm:$0xff]
    %v391 = vld [vmem:[#allocation11 + $0x70] sm:$0xff]
    %v392 = vld [vmem:[#allocation11 + $0x78] sm:$0xff]
    %v393 = vld [vmem:[%s10] sm:$0x1]
    %v395 = vperm.slane %v393, 0
    %397 = vmatpush.msra.mxu0 %v392
    %398 = vmatpush.msra.mxu0 %v391
    %399 = vmatpush.msra.mxu0 %v390
    %400 = vmatpush.msra.mxu0 %v389
    %401 = vmatpush.msra.mxu0 %v388
    %402 = vmatpush.msra.mxu0 %v387
    %403 = vmatpush.msra.mxu0 %v386
    %404 = vmatpush.msra.mxu0 %v385
    %405 = vmatpush.msra.mxu0 %v384
    %406 = vmatpush.msra.mxu0 %v383
    %407 = vmatpush.msra.mxu0 %v382
    %408 = vmatpush.msra.mxu0 %v381
    %409 = vmatpush.msra.mxu0 %v380
    %410 = vmatpush.msra.mxu0 %v379
    %411 = vmatpush.msra.mxu0 %v378
    %412 = vmatpush.msra.mxu0 %v377
    %413 = vmatmul.f32.gmra.mxu0 %v372
    %v414 = vpop.f32.mrf.mxu0
    %v415 = vadd.f32 %v395, %v414
    %416 = vmatmul.f32.gmra.mxu0 %v375
    %v417 = vpop.f32.mrf.mxu0
    %v418 = vadd.f32 %v395, %v417
    %419 = vdwg.mxu0
    %v420 = vmax.f32 %v415, 0.0
    %v421 = vmax.f32 %v418, 0.0
    %v422 = vld [vmem:[#allocation13] sm:$0xff]
    %v423 = vld [vmem:[#allocation13 + $0x8] sm:$0xff]
    %v424 = vld [vmem:[#allocation13 + $0x10] sm:$0xff]
    %v425 = vld [vmem:[#allocation13 + $0x18] sm:$0xff]
    %v426 = vld [vmem:[#allocation13 + $0x20] sm:$0xff]
    %v427 = vld [vmem:[#allocation13 + $0x28] sm:$0xff]
    %v428 = vld [vmem:[#allocation13 + $0x30] sm:$0xff]
    %v429 = vld [vmem:[#allocation13 + $0x38] sm:$0xff]
    %v430 = vld [vmem:[#allocation13 + $0x40] sm:$0xff]
    %v431 = vld [vmem:[#allocation13 + $0x48] sm:$0xff]
    %v432 = vld [vmem:[#allocation13 + $0x50] sm:$0xff]
    %v433 = vld [vmem:[#allocation13 + $0x58] sm:$0xff]
    %v434 = vld [vmem:[#allocation13 + $0x60] sm:$0xff]
    %v435 = vld [vmem:[#allocation13 + $0x68] sm:$0xff]
    %v436 = vld [vmem:[#allocation13 + $0x70] sm:$0xff]
    %v437 = vld [vmem:[#allocation13 + $0x78] sm:$0xff]
    %v438 = vld [vmem:[%s12] sm:$0x1]
    %v440 = vperm.slane %v438, 0
    %442 = vmatpush.msra.mxu0 %v437
    %443 = vmatpush.msra.mxu0 %v436
    %444 = vmatpush.msra.mxu0 %v435
    %445 = vmatpush.msra.mxu0 %v434
    %446 = vmatpush.msra.mxu0 %v433
    %447 = vmatpush.msra.mxu0 %v432
    %448 = vmatpush.msra.mxu0 %v431
    %449 = vmatpush.msra.mxu0 %v430
    %450 = vmatpush.msra.mxu0 %v429
    %451 = vmatpush.msra.mxu0 %v428
    %452 = vmatpush.msra.mxu0 %v427
    %453 = vmatpush.msra.mxu0 %v426
    %454 = vmatpush.msra.mxu0 %v425
    %455 = vmatpush.msra.mxu0 %v424
    %456 = vmatpush.msra.mxu0 %v423
    %457 = vmatpush.msra.mxu0 %v422
    %458 = vmatmul.f32.gmra.mxu0 %v420
    %v459 = vpop.f32.mrf.mxu0
    %v460 = vadd.f32 %v440, %v459
    %461 = vmatmul.f32.gmra.mxu0 %v421
    %v462 = vpop.f32.mrf.mxu0
    %v463 = vadd.f32 %v440, %v462
    %464 = vdwg.mxu0
    %v465 = vmax.f32 %v460, 0.0
    %v466 = vmax.f32 %v463, 0.0
    %v467 = vld [vmem:[#allocation14] sm:$0xff]
    %v468 = vld [vmem:[#allocation14 + $0x8] sm:$0xff]
    %v469 = vld [vmem:[#allocation14 + $0x10] sm:$0xff]
    %v470 = vld [vmem:[#allocation14 + $0x18] sm:$0xff]
    %v471 = vld [vmem:[#allocation14 + $0x20] sm:$0xff]
    %v472 = vld [vmem:[#allocation14 + $0x28] sm:$0xff]
    %v473 = vld [vmem:[#allocation14 + $0x30] sm:$0xff]
    %v474 = vld [vmem:[#allocation14 + $0x38] sm:$0xff]
    %v475 = vld [vmem:[#allocation14 + $0x40] sm:$0xff]
    %v476 = vld [vmem:[#allocation14 + $0x48] sm:$0xff]
    %v477 = vld [vmem:[#allocation14 + $0x50] sm:$0xff]
    %v478 = vld [vmem:[#allocation14 + $0x58] sm:$0xff]
    %v479 = vld [vmem:[#allocation14 + $0x60] sm:$0xff]
    %v480 = vld [vmem:[#allocation14 + $0x68] sm:$0xff]
    %v481 = vld [vmem:[#allocation14 + $0x70] sm:$0xff]
    %v482 = vld [vmem:[#allocation14 + $0x78] sm:$0xff]
    %v483 = vld [vmem:[%s14] sm:$0x1]
    %v485 = vperm.slane %v483, 0
    %487 = vmatpush.msra.mxu0 %v482
    %488 = vmatpush.msra.mxu0 %v481
    %489 = vmatpush.msra.mxu0 %v480
    %490 = vmatpush.msra.mxu0 %v479
    %491 = vmatpush.msra.mxu0 %v478
    %492 = vmatpush.msra.mxu0 %v477
    %493 = vmatpush.msra.mxu0 %v476
    %494 = vmatpush.msra.mxu0 %v475
    %495 = vmatpush.msra.mxu0 %v474
    %496 = vmatpush.msra.mxu0 %v473
    %497 = vmatpush.msra.mxu0 %v472
    %498 = vmatpush.msra.mxu0 %v471
    %499 = vmatpush.msra.mxu0 %v470
    %500 = vmatpush.msra.mxu0 %v469
    %501 = vmatpush.msra.mxu0 %v468
    %502 = vmatpush.msra.mxu0 %v467
    %503 = vmatmul.f32.gmra.mxu0 %v465
    %v504 = vpop.f32.mrf.mxu0
    %v505 = vadd.f32 %v485, %v504
    %506 = vmatmul.f32.gmra.mxu0 %v466
    %v507 = vpop.f32.mrf.mxu0
    %v508 = vadd.f32 %v485, %v507
    %509 = vdwg.mxu0
    %v510 = vmax.f32 %v505, 0.0
    %v511 = vmax.f32 %v508, 0.0
    %v512 = vld [vmem:[#allocation16] sm:$0xff]
    %v513 = vld [vmem:[#allocation16 + $0x8] sm:$0xff]
    %v514 = vld [vmem:[#allocation16 + $0x10] sm:$0xff]
    %v515 = vld [vmem:[#allocation16 + $0x18] sm:$0xff]
    %v516 = vld [vmem:[#allocation16 + $0x20] sm:$0xff]
    %v517 = vld [vmem:[#allocation16 + $0x28] sm:$0xff]
    %v518 = vld [vmem:[#allocation16 + $0x30] sm:$0xff]
    %v519 = vld [vmem:[#allocation16 + $0x38] sm:$0xff]
    %v520 = vld [vmem:[#allocation16 + $0x40] sm:$0xff]
    %v521 = vld [vmem:[#allocation16 + $0x48] sm:$0xff]
    %v522 = vld [vmem:[#allocation16 + $0x50] sm:$0xff]
    %v523 = vld [vmem:[#allocation16 + $0x58] sm:$0xff]
    %v524 = vld [vmem:[#allocation16 + $0x60] sm:$0xff]
    %v525 = vld [vmem:[#allocation16 + $0x68] sm:$0xff]
    %v526 = vld [vmem:[#allocation16 + $0x70] sm:$0xff]
    %v527 = vld [vmem:[#allocation16 + $0x78] sm:$0xff]
    %v528 = vld [vmem:[%s16] sm:$0x1]
    %v530 = vperm.slane %v528, 0
    %532 = vmatpush.msra.mxu0 %v527
    %533 = vmatpush.msra.mxu0 %v526
    %534 = vmatpush.msra.mxu0 %v525
    %535 = vmatpush.msra.mxu0 %v524
    %536 = vmatpush.msra.mxu0 %v523
    %537 = vmatpush.msra.mxu0 %v522
    %538 = vmatpush.msra.mxu0 %v521
    %539 = vmatpush.msra.mxu0 %v520
    %540 = vmatpush.msra.mxu0 %v519
    %541 = vmatpush.msra.mxu0 %v518
    %542 = vmatpush.msra.mxu0 %v517
    %543 = vmatpush.msra.mxu0 %v516
    %544 = vmatpush.msra.mxu0 %v515
    %545 = vmatpush.msra.mxu0 %v514
    %546 = vmatpush.msra.mxu0 %v513
    %547 = vmatpush.msra.mxu0 %v512
    %548 = vmatmul.f32.gmra.mxu0 %v510
    %v549 = vpop.f32.mrf.mxu0
    %v550 = vadd.f32 %v530, %v549
    %551 = vmatmul.f32.gmra.mxu0 %v511
    %v552 = vpop.f32.mrf.mxu0
    %v553 = vadd.f32 %v530, %v552
    %554 = vdwg.mxu0
    %v555 = vadd.f32 %v372, %v550
    %v556 = vadd.f32 %v375, %v553
    %557 = vst [vmem:[#allocation17] sm:$0xff] %v555
    %558 = vst [vmem:[#allocation17 + $0x8] sm:$0xff] %v556
    // Predicated region
    $region106: #{tpu_custom_call.1} parent=1 // pred_check
      _
    $region107: #{tpu_custom_call.1} parent=1 // pred_check_branch
      %560 = sbr.rel (0) target = $region109
    $region108: #{tpu_custom_call.1} parent=1 // pred_region
      %562 = vsyncadd [#allocation4], 0
      %s563 = sshll.u32 [#allocation17], 4
      %s564 = int_to_ptr.vmem [resolvable:$true] %s563
      %s565 = sshll.u32 %s17, 4
      %s566 = int_to_ptr.hbm [resolvable:$true] %s565
      %571 = dma.vmem_to_hbm [thread:$0]  %s564, 256, %s566, [#allocation4], 128, 128, 8
    $region109: #{tpu_custom_call.1} parent=1 // pred_fallthru
      _
    // Predicated region
    $region110: #{tpu_custom_call.1} parent=1 // pred_check
      _
    $region111: #{tpu_custom_call.1} parent=1 // pred_check_branch
      %573 = sbr.rel (0) target = $region113
    $region112: #{tpu_custom_call.1} parent=1 // pred_region
      %575 = dma.done [#allocation4], 256
    $region113: #{tpu_custom_call.1} parent=1 // pred_fallthru
      _
    %576 = vsyncpa [#allocation3], 1
    %577 = vsyncpa [#allocation6], 1
    %578 = vsyncpa [#allocation9], 1
    %579 = vsyncpa [#allocation12], 1
    %580 = vsyncpa [#allocation15], 1
    %581 = vsyncpa [#allocation4], 1

</llo_original>
